<compile_context>
chip_gen: v7x
topology: tpu7x:2x2x1
jax: 0.10.0
libtpu: 0.0.40
codegen_flags: <defaults>
</compile_context>

<pallas_src>
import math

import jax
import jax.numpy as jnp
from jax.experimental import pallas as pl
from jax.experimental.pallas import tpu as pltpu


def _embed_nd_kernel(ids_ref, w_ref, out_ref):
    """ids_ref: (K, tmr) f32,  w_ref: (K, L) f32,  out_ref: (tmr, L) f32.

    angle[r, j] = sum_k ids[k, r] * w[k, j]
                = pos(owning ids-row/axis of lane j) * omega(lane j) + phase(lane j)
    (W is block-structured per folded ids-row; its last row pairs with the constant-1.0
     row appended to ids and carries the phases, so the whole affine map is one MXU pass.)
    out[r, j]   = cos(angle), phase pattern [0, +pi/2, -pi/2, 0]
                = [cos, -sin, sin, cos] per frequency == final (..., Dh, 2, 2) byte layout.
    """
    angle = jax.lax.dot_general(
        ids_ref[...],
        w_ref[...],
        dimension_numbers=(((0,), (0,)), ((), ())),   # contract K on both: ids^T @ W
        preferred_element_type=jnp.float32,
        precision=jax.lax.Precision.HIGHEST,          # f32-exact angles for integer ids
    )
    out_ref[...] = jnp.cos(angle)


def _build_w(axes_dim, theta, fold):
    """(K0+1, L) matrix: omega rows (block-diagonal per folded ids-row) + one phase row.

    Lane layout for one logical ids-row (l_row = 4*Dh lanes):
      lane j -> frequency f = j // 4 (frequencies concatenated in axis order),
                2x2 slot  p = j % 4 with phase [0, +pi/2, -pi/2, 0].
    `fold` consecutive ids-rows are packed side by side along the lane dim.
    """
    n_axes = len(axes_dim)
    omega_list, axis_list = [], []
    for a, d in enumerate(axes_dim):
        assert d % 2 == 0, "axes_dim entries must be even"
        scale = jnp.arange(0, d, 2, dtype=jnp.float32) / d
        omega_list.append(1.0 / (theta ** scale))            # (d/2,), same formula as ref
        axis_list.append(jnp.full((d // 2,), a, jnp.int32))
    omega = jnp.concatenate(omega_list)                       # (Dh,)
    axis_of = jnp.concatenate(axis_list)                      # (Dh,)
    dh = omega.shape[0]
    l_row = 4 * dh

    omega_rep = jnp.repeat(omega, 4)                          # lane j -> omega[j//4]
    axis_rep = jnp.repeat(axis_of, 4)                         # lane j -> owning axis
    phase_row = jnp.tile(
        jnp.array([0.0, math.pi / 2, -math.pi / 2, 0.0], jnp.float32), dh)

    k0 = fold * n_axes
    l_tot = fold * l_row
    w = jnp.zeros((k0 + 1, l_tot), jnp.float32)
    for h in range(fold):
        sl = slice(h * l_row, (h + 1) * l_row)
        for a in range(n_axes):
            col = jnp.where(axis_rep == a, omega_rep, 0.0)
            w = w.at[h * n_axes + a, sl].set(col)
    w = w.at[k0, :].set(jnp.tile(phase_row, fold))            # phase row (pairs with ones-row)
    return w


def _tpu_tuning():
    """(block_bytes, megacore) picked from the attached TPU generation."""
    kind = ""
    try:
        dev = jax.devices()[0]
        if dev.platform == "tpu":
            kind = dev.device_kind.lower()
    except Exception:
        pass
    megacore = any(t in kind for t in ("v4", "v5p", "7"))     # 2 TensorCores share the grid
    block_bytes = (4 << 20) if megacore else (8 << 20)        # smaller tiles on 64 MiB v7x VMEM
    return block_bytes, megacore


def embed_nd(ids, axes_dim, theta, *, block_bytes=None, megacore=None):
    """ids: (B, N, n_axes) -> (B, 1, N, sum(axes_dim)//2, 2, 2) float32."""
    B, N, n_axes = ids.shape
    assert n_axes == len(axes_dim)
    dh = sum(axes_dim) // 2
    l_row = 4 * dh                                    # output f32 values per ids-row
    fold = 128 // math.gcd(l_row, 128)                # exact rule: L = lcm(l_row, 128)
    L = fold * l_row                                  # multiple of 128 -> lane-dense stores
    K0 = fold * n_axes
    K = K0 + 1                                        # + constant-1 row carrying the phase
    M = B * N
    mf = pl.cdiv(M, fold)                             # folded rows

    auto_bytes, auto_mega = _tpu_tuning()
    if block_bytes is None:
        block_bytes = auto_bytes
    if megacore is None:
        megacore = auto_mega

    # Row-tile size and grid split (generation aware).
    row_bytes = L * 4
    rows_per_block = max(128, (block_bytes // row_bytes) // 128 * 128)
    nblocks = pl.cdiv(mf, rows_per_block)
    if megacore and mf >= 256:
        nblocks = max(nblocks, 2)                     # feed both TensorCores
    if megacore and nblocks > 1 and (nblocks % 2 == 1):
        nblocks += 1                                  # balanced megacore split
    if nblocks == 1:
        tmr = max(8, pl.cdiv(mf, 8) * 8)              # single block == full (padded) array
    else:
        tmr = pl.cdiv(pl.cdiv(mf, nblocks), 128) * 128  # 128-lane-aligned ids blocks
    mf_pad = nblocks * tmr
    m_pad = mf_pad * fold

    # ids: pad rows, refold, transpose to (K0, rows), append ones-row for the phase.
    ids2d = ids.reshape(M, n_axes).astype(jnp.float32)
    if m_pad != M:
        ids2d = jnp.pad(ids2d, ((0, m_pad - M), (0, 0)))      # zero-pad tail rows
    ids_t = ids2d.reshape(mf_pad, K0).T                        # (K0, mf_pad): tiny transpose
    ids_aug = jnp.concatenate(
        [ids_t, jnp.ones((1, mf_pad), jnp.float32)], axis=0)  # (K, mf_pad)

    w = _build_w(axes_dim, theta, fold)                        # (K, L)

    # VMEM budget: double-buffered out + ids blocks + the constant W block.
    kpad = pl.cdiv(K, 8) * 8
    need = 2 * (tmr * L * 4 + kpad * tmr * 4 + kpad * L * 4) + (2 << 20)
    vmem_limit = int(min(max(need, 32 << 20), 64 << 20))

    out = pl.pallas_call(
        _embed_nd_kernel,
        out_shape=jax.ShapeDtypeStruct((mf_pad, L), jnp.float32),
        grid_spec=pltpu.PrefetchScalarGridSpec(
            num_scalar_prefetch=0,
            grid=(nblocks,),
            in_specs=[
                pl.BlockSpec((K, tmr), lambda i: (0, i)),     # ids^T: lane-dense along rows
                pl.BlockSpec((K, L), lambda i: (0, 0)),       # constant block -> DMA'd once
            ],
            out_specs=pl.BlockSpec((tmr, L), lambda i: (i, 0)),
        ),
        compiler_params=pltpu.CompilerParams(
            dimension_semantics=("parallel",),                # megacore sharding on v4/v7x
            vmem_limit_bytes=vmem_limit),
    )(ids_aug, w)

    # Everything below is metadata-only except a cheap slice when padded.
    emb = out.reshape(m_pad, l_row)
    if m_pad != M:
        emb = emb[:M]
    emb = emb.reshape(B, N, dh, 2, 2)
    return emb[:, None]                                        # unsqueeze(1)


def _reference(ids, axes_dim, theta):
    """Plain-JAX replica of the PyTorch EmbedND.forward (pure elementwise f32 math)."""
    outs = []
    for a, d in enumerate(axes_dim):
        pos = ids[..., a].astype(jnp.float32)                  # (B, N)
        scale = jnp.arange(0, d, 2, dtype=jnp.float32) / d
        omega = 1.0 / (theta ** scale)                         # (d/2,)
        angle = pos[..., None] * omega                         # (B, N, d/2), no MXU ambiguity
        out = jnp.stack([jnp.cos(angle), -jnp.sin(angle),
                         jnp.sin(angle), jnp.cos(angle)], axis=-1)
        outs.append(out.reshape(*angle.shape, 2, 2))
    emb = jnp.concatenate(outs, axis=-3)
    return emb[:, None, ...]


if __name__ == "__main__":
    axes_dim = [8, 12, 12]
    dim = sum(axes_dim)          # 32
    theta = 10000
    k1, k2, k3 = jax.random.split(jax.random.PRNGKey(0), 3)

    # Case 1: small, exactly tiled shapes.
    B, N = 2, 8
    ids = jax.random.randint(k1, (B, N, len(axes_dim)), 0, 64).astype(jnp.float32)
    out = jax.block_until_ready(embed_nd(ids, axes_dim, theta))
    ref = _reference(ids, axes_dim, theta)
    assert out.shape == (B, 1, N, dim // 2, 2, 2), out.shape
    assert out.dtype == jnp.float32
    assert float(jnp.max(jnp.abs(out - ref))) < 1e-4, float(jnp.max(jnp.abs(out - ref)))

    # Case 2: ragged row count (exercises the zero-padded tail + wrapper slice path).
    B2, N2 = 2, 7
    ids2 = jax.random.randint(k2, (B2, N2, len(axes_dim)), 0, 64).astype(jnp.float32)
    out2 = jax.block_until_ready(embed_nd(ids2, axes_dim, theta))
    ref2 = _reference(ids2, axes_dim, theta)
    assert out2.shape == (B2, 1, N2, dim // 2, 2, 2), out2.shape
    assert float(jnp.max(jnp.abs(out2 - ref2))) < 1e-4, float(jnp.max(jnp.abs(out2 - ref2)))

    # Case 3: large position ids (checks the f32-exact angle path; a bf16
    # default-precision matmul would be off by O(0.1-1) here).
    ids3 = jax.random.randint(k3, (1, 16, len(axes_dim)), 0, 512).astype(jnp.float32)
    out3 = jax.block_until_ready(embed_nd(ids3, axes_dim, theta))
    ref3 = _reference(ids3, axes_dim, theta)
    assert float(jnp.max(jnp.abs(out3 - ref3))) < 2e-3, float(jnp.max(jnp.abs(out3 - ref3)))

    print("KERNEL_OK")
</pallas_src>

<mosaic_0001>
module attributes {stable_mosaic.version = 11 : i64} {
  func.func @_embed_nd_kernel(%arg0: i32, %arg1: memref<7x8xf32, #tpu.memory_space<vmem>>, %arg2: memref<7x128xf32, #tpu.memory_space<vmem>>, %arg3: memref<8x128xf32, #tpu.memory_space<vmem>>) attributes {dimension_semantics = [#tpu.dimension_semantics<parallel>], iteration_bounds = array<i64: 1>, scalar_prefetch = 0 : i64, scratch_operands = 0 : i64, tpu.core_type = #tpu.core_type<tc>, window_params = [{transform_indices = @transform_0, window_bounds = array<i64: 7, 8>}, {pipeline_mode = #tpu.pipeline_mode<synchronous>, transform_indices = @transform_1, window_bounds = array<i64: 7, 128>}, {transform_indices = @transform_2, window_bounds = array<i64: 8, 128>}]} {
    %c0 = arith.constant 0 : index
    %c0_0 = arith.constant 0 : index
    %0 = vector.load %arg1[%c0, %c0_0] : memref<7x8xf32, #tpu.memory_space<vmem>>, vector<7x8xf32>
    %c0_1 = arith.constant 0 : index
    %c0_2 = arith.constant 0 : index
    %1 = vector.load %arg2[%c0_1, %c0_2] : memref<7x128xf32, #tpu.memory_space<vmem>>, vector<7x128xf32>
    %cst = arith.constant dense<0.000000e+00> : vector<8x128xf32>
    %2 = tpu.matmul %0, %1, %cst {dimension_numbers = #tpu.dot_dimension_numbers<[0], [0], [1], [1], [0, 1, 1, 1], [], []>, precision = #tpu.contract_precision<fp32>} : vector<7x8xf32>, vector<7x128xf32>, vector<8x128xf32> -> vector<8x128xf32>
    %3 = math.cos %2 : vector<8x128xf32>
    %c0_3 = arith.constant 0 : index
    %c0_4 = arith.constant 0 : index
    %4 = vector.load %arg3[%c0_3, %c0_4] : memref<8x128xf32, #tpu.memory_space<vmem>>, vector<8x128xf32>
    tpu.vector_store %arg3[%c0_3, %c0_4], %3 {strides = array<i32>} : memref<8x128xf32, #tpu.memory_space<vmem>>, vector<8x128xf32>,
    return
  }
  func.func @transform_0(%arg0: i32) -> (i32, i32) {
    %c0_i32 = arith.constant 0 : i32
    %c0_i32_0 = arith.constant 0 : i32
    return %c0_i32, %arg0 : i32, i32
  }
  func.func @transform_1(%arg0: i32) -> (i32, i32) {
    %c0_i32 = arith.constant 0 : i32
    %c0_i32_0 = arith.constant 0 : i32
    %c0_i32_1 = arith.constant 0 : i32
    return %c0_i32, %c0_i32_0 : i32, i32
  }
  func.func @transform_2(%arg0: i32) -> (i32, i32) {
    %c0_i32 = arith.constant 0 : i32
    %c0_i32_0 = arith.constant 0 : i32
    return %arg0, %c0_i32 : i32, i32
  }
}

</mosaic_0001>

<llo_original>
// kernel: tpu_custom_call.1
$region0: #{tpu_custom_call.1}
  #allocation0 [shape = 'u32[]', space=smem, size = 0x4, offset = 0x4, fixed_abs, tag = 'smem constant byte address 0x4 - core index']
  #allocation1 [shape = 'u32[144,128]{1,0:T(1,128)}', space=vmem, size = 0x12000, scoped, tag = 'internal scratch']
  %s0 = inlined_call_operand.hbm [shape: f32[7,8], index: 0, kind: input, shape index: {}]
  %s1 = inlined_call_operand.hbm [shape: f32[7,128], index: 1, kind: input, shape index: {}]
  %s2 = inlined_call_operand.hbm [shape: f32[8,128], index: 2, kind: output, shape index: {}]
  %s3 = sld [smem:[#allocation0]]
  $region26: #{tpu_custom_call.1} parent=0
    _
  %s5 = ssub.s32 1, %s3
  %s6 = scalar_select 0, %s5, %s3
  $region1: #{tpu_custom_call.1} parent=0
    #allocation2 [shape = 'u8[4096]{0}', space=vmem, size = 0x1000, scoped, tag = 'input window, operand 0, single buffered']
    #allocation3 [shape = 's32[1]{0}', space=sflag, size = 0x4, scoped, tag = 'scoped memory for tpu_custom_call.1']
    #allocation4 [shape = 's32[1]{0}', space=sflag, size = 0x4, scoped, tag = 'scoped memory for tpu_custom_call.1']
    #allocation5 [shape = 'u8[4096]{0}', space=vmem, size = 0x1000, scoped, tag = 'input window, operand 1, single buffered']
    #allocation6 [shape = 's32[1]{0}', space=sflag, size = 0x4, scoped, tag = 'scoped memory for tpu_custom_call.1']
    #allocation7 [shape = 'u8[4096]{0}', space=vmem, size = 0x1000, scoped, tag = 'output window, operand 0, single buffered']
    %7 = vsyncpa [#allocation3], 0
    %8 = vsyncpa [#allocation6], 0
    %9 = vsyncpa [#allocation4], 0
    // Predicated region
    $region2: #{tpu_custom_call.1} parent=1 // pred_check
      _
    $region3: #{tpu_custom_call.1} parent=1 // pred_check_branch
      %11 = sbr.rel (0) target = $region5
    $region4: #{tpu_custom_call.1} parent=1 // pred_region
      %s13 = ssub.s32 128, 128
      %14 = vsyncadd [#allocation3], %s13
      %s16 = sshll.u32 [#allocation2], 4
      %s17 = int_to_ptr.vmem [resolvable:$true] %s16
      %19 = dma.hbm_to_vmem [thread:$0]  %s0, 128, %s17, [#allocation3]
    $region5: #{tpu_custom_call.1} parent=1 // pred_fallthru
      _
    // Predicated region
    $region6: #{tpu_custom_call.1} parent=1 // pred_check
      _
    $region7: #{tpu_custom_call.1} parent=1 // pred_check_branch
      %21 = sbr.rel (0) target = $region9
    $region8: #{tpu_custom_call.1} parent=1 // pred_region
      %s23 = ssub.s32 128, 128
      %24 = vsyncadd [#allocation6], %s23
      %s26 = sshll.u32 [#allocation5], 4
      %s27 = int_to_ptr.vmem [resolvable:$true] %s26
      %29 = dma.hbm_to_vmem [thread:$0]  %s1, 128, %s27, [#allocation6]
    $region9: #{tpu_custom_call.1} parent=1 // pred_fallthru
      _
    // Predicated region
    $region10: #{tpu_custom_call.1} parent=1 // pred_check
      _
    $region11: #{tpu_custom_call.1} parent=1 // pred_check_branch
      %31 = sbr.rel (0) target = $region13
    $region12: #{tpu_custom_call.1} parent=1 // pred_region
      %32 = dma.done [#allocation3], 128
    $region13: #{tpu_custom_call.1} parent=1 // pred_fallthru
      _
    // Predicated region
    $region14: #{tpu_custom_call.1} parent=1 // pred_check
      _
    $region15: #{tpu_custom_call.1} parent=1 // pred_check_branch
      %34 = sbr.rel (0) target = $region17
    $region16: #{tpu_custom_call.1} parent=1 // pred_region
      %35 = dma.done [#allocation6], 128
    $region17: #{tpu_custom_call.1} parent=1 // pred_fallthru
      _
    %v36 = vld [vmem:[#allocation2] sm:$0x7f]
    %v37 = vld [vmem:[#allocation5] sm:$0x7f]
    %38 = vxpose.xlu0.b32.start [1/16] %v36, 128
    %39 = vxpose.xlu0.b32.cont [2/16] 0.0, 128
    %40 = vxpose.xlu0.b32.cont [3/16] 0.0, 128
    %41 = vxpose.xlu0.b32.cont [4/16] 0.0, 128
    %42 = vxpose.xlu0.b32.cont [5/16] 0.0, 128
    %43 = vxpose.xlu0.b32.cont [6/16] 0.0, 128
    %44 = vxpose.xlu0.b32.cont [7/16] 0.0, 128
    %45 = vxpose.xlu0.b32.cont [8/16] 0.0, 128
    %46 = vxpose.xlu0.b32.cont [9/16] 0.0, 128
    %47 = vxpose.xlu0.b32.cont [10/16] 0.0, 128
    %48 = vxpose.xlu0.b32.cont [11/16] 0.0, 128
    %49 = vxpose.xlu0.b32.cont [12/16] 0.0, 128
    %50 = vxpose.xlu0.b32.cont [13/16] 0.0, 128
    %51 = vxpose.xlu0.b32.cont [14/16] 0.0, 128
    %52 = vxpose.xlu0.b32.cont [15/16] 0.0, 128
    %53 = vxpose.xlu0.b32.end [16/16] 0.0, 128
    %v54 = vpop.trf.xlu0
    %v55 = vpop.trf.xlu0
    %v56 = vpop.trf.xlu0
    %v57 = vpop.trf.xlu0
    %v58 = vpop.trf.xlu0
    %v59 = vpop.trf.xlu0
    %v60 = vpop.trf.xlu0
    %v61 = vpop.trf.xlu0
    %v62 = vpop.trf.xlu0
    %v63 = vpop.trf.xlu0
    %v64 = vpop.trf.xlu0
    %v65 = vpop.trf.xlu0
    %v66 = vpop.trf.xlu0
    %v67 = vpop.trf.xlu0
    %v68 = vpop.trf.xlu0
    %v69 = vpop.trf.xlu0
    %vm70 = vcmask 56320
    %v72 = vsel %vm70, %v54, 0
    %vm74 = vcmask 1046528
    %v76 = vsel %vm74, %v37, 0
    %78 = vmatprep.subr.mxu0 0.0
    %v79 = vand.u32 %v76, 4294901760
    %80 = vmatpush1.msra.mxu0 %v79
    %81 = vmatprep.subr.mxu0 0.0
    %82 = vmatpush1.msra.mxu0 0.0
    %83 = vmatprep.subr.mxu0 0.0
    %84 = vmatpush1.msra.mxu0 0.0
    %85 = vmatprep.subr.mxu0 0.0
    %86 = vmatpush1.msra.mxu0 0.0
    %87 = vmatprep.subr.mxu0 0.0
    %88 = vmatpush1.msra.mxu0 0.0
    %89 = vmatprep.subr.mxu0 0.0
    %90 = vmatpush1.msra.mxu0 0.0
    %91 = vmatprep.subr.mxu0 0.0
    %92 = vmatpush1.msra.mxu0 0.0
    %93 = vmatprep.subr.mxu0 0.0
    %94 = vmatpush1.msra.mxu0 0.0
    %95 = vmatprep.subr.mxu0 0.0
    %96 = vmatpush1.msra.mxu0 0.0
    %97 = vmatprep.subr.mxu0 0.0
    %98 = vmatpush1.msra.mxu0 0.0
    %99 = vmatprep.subr.mxu0 0.0
    %100 = vmatpush1.msra.mxu0 0.0
    %101 = vmatprep.subr.mxu0 0.0
    %102 = vmatpush1.msra.mxu0 0.0
    %103 = vmatprep.subr.mxu0 0.0
    %104 = vmatpush1.msra.mxu0 0.0
    %105 = vmatprep.subr.mxu0 0.0
    %106 = vmatpush1.msra.mxu0 0.0
    %107 = vmatprep.subr.mxu0 0.0
    %108 = vmatpush1.msra.mxu0 0.0
    %109 = vmatprep.subr.mxu0 0.0
    %110 = vmatpush1.msra.mxu0 0.0
    %111 = vmatprep.subr.mxu0 0.0
    %112 = vmatpush1.msra.mxu0 0.0
    %113 = vmatprep.subr.mxu0 0.0
    %114 = vmatpush1.msra.mxu0 0.0
    %115 = vmatprep.subr.mxu0 0.0
    %116 = vmatpush1.msra.mxu0 0.0
    %117 = vmatprep.subr.mxu0 0.0
    %118 = vmatpush1.msra.mxu0 0.0
    %119 = vmatprep.subr.mxu0 0.0
    %120 = vmatpush1.msra.mxu0 0.0
    %121 = vmatprep.subr.mxu0 0.0
    %122 = vmatpush1.msra.mxu0 0.0
    %123 = vmatprep.subr.mxu0 0.0
    %124 = vmatpush1.msra.mxu0 0.0
    %125 = vmatprep.subr.mxu0 0.0
    %126 = vmatpush1.msra.mxu0 0.0
    %127 = vmatprep.subr.mxu0 0.0
    %128 = vmatpush1.msra.mxu0 0.0
    %129 = vmatprep.subr.mxu0 0.0
    %130 = vmatpush1.msra.mxu0 0.0
    %131 = vmatprep.subr.mxu0 0.0
    %132 = vmatpush1.msra.mxu0 0.0
    %133 = vmatprep.subr.mxu0 0.0
    %134 = vmatpush1.msra.mxu0 0.0
    %135 = vmatprep.subr.mxu0 0.0
    %136 = vmatpush1.msra.mxu0 0.0
    %137 = vmatprep.subr.mxu0 0.0
    %138 = vmatpush1.msra.mxu0 0.0
    %139 = vmatprep.subr.mxu0 0.0
    %140 = vmatpush1.msra.mxu0 0.0
    %141 = vmatprep.subr.mxu0 0.0
    %142 = vmatpush1.msra.mxu0 0.0
    %143 = vmatprep.mubr.f32.mxu0 0.0
    %v144 = vand.u32 %v72, 4294901760
    %v145 = vsub.f32 %v72, %v144
    %v146 = vand.u32 %v145, 4294901760
    %v147 = vsub.f32 %v145, %v146
    %v148 = vand.u32 %v147, 4294901760
    %149 = vmatmul.mubr.f32.gmra.mrb[0].mxu0 %v148
    %v150 = vpop.f32.mrb[0].mxu0
    %v151 = vadd.f32 0.0, %v150
    %v152 = vpop.f32.mrb[0].mxu0
    %153 = vdwg.mxu0
    %154 = vmatprep.subr.mxu0 0.0
    %v155 = vand.u32 %v76, 4294901760
    %v156 = vsub.f32 %v76, %v155
    %v157 = vand.u32 %v156, 4294901760
    %v158 = vsub.f32 %v156, %v157
    %v159 = vand.u32 %v158, 4294901760
    %160 = vmatpush1.msra.mxu0 %v159
    %161 = vmatprep.subr.mxu0 0.0
    %162 = vmatpush1.msra.mxu0 0.0
    %163 = vmatprep.subr.mxu0 0.0
    %164 = vmatpush1.msra.mxu0 0.0
    %165 = vmatprep.subr.mxu0 0.0
    %166 = vmatpush1.msra.mxu0 0.0
    %167 = vmatprep.subr.mxu0 0.0
    %168 = vmatpush1.msra.mxu0 0.0
    %169 = vmatprep.subr.mxu0 0.0
    %170 = vmatpush1.msra.mxu0 0.0
    %171 = vmatprep.subr.mxu0 0.0
    %172 = vmatpush1.msra.mxu0 0.0
    %173 = vmatprep.subr.mxu0 0.0
    %174 = vmatpush1.msra.mxu0 0.0
    %175 = vmatprep.subr.mxu0 0.0
    %176 = vmatpush1.msra.mxu0 0.0
    %177 = vmatprep.subr.mxu0 0.0
    %178 = vmatpush1.msra.mxu0 0.0
    %179 = vmatprep.subr.mxu0 0.0
    %180 = vmatpush1.msra.mxu0 0.0
    %181 = vmatprep.subr.mxu0 0.0
    %182 = vmatpush1.msra.mxu0 0.0
    %183 = vmatprep.subr.mxu0 0.0
    %184 = vmatpush1.msra.mxu0 0.0
    %185 = vmatprep.subr.mxu0 0.0
    %186 = vmatpush1.msra.mxu0 0.0
    %187 = vmatprep.subr.mxu0 0.0
    %188 = vmatpush1.msra.mxu0 0.0
    %189 = vmatprep.subr.mxu0 0.0
    %190 = vmatpush1.msra.mxu0 0.0
    %191 = vmatprep.subr.mxu0 0.0
    %192 = vmatpush1.msra.mxu0 0.0
    %193 = vmatprep.subr.mxu0 0.0
    %194 = vmatpush1.msra.mxu0 0.0
    %195 = vmatprep.subr.mxu0 0.0
    %196 = vmatpush1.msra.mxu0 0.0
    %197 = vmatprep.subr.mxu0 0.0
    %198 = vmatpush1.msra.mxu0 0.0
    %199 = vmatprep.subr.mxu0 0.0
    %200 = vmatpush1.msra.mxu0 0.0
    %201 = vmatprep.subr.mxu0 0.0
    %202 = vmatpush1.msra.mxu0 0.0
    %203 = vmatprep.subr.mxu0 0.0
    %204 = vmatpush1.msra.mxu0 0.0
    %205 = vmatprep.subr.mxu0 0.0
    %206 = vmatpush1.msra.mxu0 0.0
    %207 = vmatprep.subr.mxu0 0.0
    %208 = vmatpush1.msra.mxu0 0.0
    %209 = vmatprep.subr.mxu0 0.0
    %210 = vmatpush1.msra.mxu0 0.0
    %211 = vmatprep.subr.mxu0 0.0
    %212 = vmatpush1.msra.mxu0 0.0
    %213 = vmatprep.subr.mxu0 0.0
    %214 = vmatpush1.msra.mxu0 0.0
    %215 = vmatprep.subr.mxu0 0.0
    %216 = vmatpush1.msra.mxu0 0.0
    %217 = vmatprep.subr.mxu0 0.0
    %218 = vmatpush1.msra.mxu0 0.0
    %219 = vmatprep.subr.mxu0 0.0
    %220 = vmatpush1.msra.mxu0 0.0
    %221 = vmatprep.subr.mxu0 0.0
    %222 = vmatpush1.msra.mxu0 0.0
    %223 = vmatprep.mubr.f32.mxu0 0.0
    %v224 = vand.u32 %v72, 4294901760
    %225 = vmatmul.mubr.f32.gmra.mrb[0].mxu0 %v224
    %v226 = vpop.f32.mrb[0].mxu0
    %v227 = vadd.f32 %v151, %v226
    %v228 = vpop.f32.mrb[0].mxu0
    %229 = vdwg.mxu0
    %230 = vmatprep.subr.mxu0 0.0
    %v231 = vand.u32 %v76, 4294901760
    %v232 = vsub.f32 %v76, %v231
    %233 = vmatpush1.msra.mxu0 %v232
    %234 = vmatprep.subr.mxu0 0.0
    %235 = vmatpush1.msra.mxu0 0.0
    %236 = vmatprep.subr.mxu0 0.0
    %237 = vmatpush1.msra.mxu0 0.0
    %238 = vmatprep.subr.mxu0 0.0
    %239 = vmatpush1.msra.mxu0 0.0
    %240 = vmatprep.subr.mxu0 0.0
    %241 = vmatpush1.msra.mxu0 0.0
    %242 = vmatprep.subr.mxu0 0.0
    %243 = vmatpush1.msra.mxu0 0.0
    %244 = vmatprep.subr.mxu0 0.0
    %245 = vmatpush1.msra.mxu0 0.0
    %246 = vmatprep.subr.mxu0 0.0
    %247 = vmatpush1.msra.mxu0 0.0
    %248 = vmatprep.subr.mxu0 0.0
    %249 = vmatpush1.msra.mxu0 0.0
    %250 = vmatprep.subr.mxu0 0.0
    %251 = vmatpush1.msra.mxu0 0.0
    %252 = vmatprep.subr.mxu0 0.0
    %253 = vmatpush1.msra.mxu0 0.0
    %254 = vmatprep.subr.mxu0 0.0
    %255 = vmatpush1.msra.mxu0 0.0
    %256 = vmatprep.subr.mxu0 0.0
    %257 = vmatpush1.msra.mxu0 0.0
    %258 = vmatprep.subr.mxu0 0.0
    %259 = vmatpush1.msra.mxu0 0.0
    %260 = vmatprep.subr.mxu0 0.0
    %261 = vmatpush1.msra.mxu0 0.0
    %262 = vmatprep.subr.mxu0 0.0
    %263 = vmatpush1.msra.mxu0 0.0
    %264 = vmatprep.subr.mxu0 0.0
    %265 = vmatpush1.msra.mxu0 0.0
    %266 = vmatprep.subr.mxu0 0.0
    %267 = vmatpush1.msra.mxu0 0.0
    %268 = vmatprep.subr.mxu0 0.0
    %269 = vmatpush1.msra.mxu0 0.0
    %270 = vmatprep.subr.mxu0 0.0
    %271 = vmatpush1.msra.mxu0 0.0
    %272 = vmatprep.subr.mxu0 0.0
    %273 = vmatpush1.msra.mxu0 0.0
    %274 = vmatprep.subr.mxu0 0.0
    %275 = vmatpush1.msra.mxu0 0.0
    %276 = vmatprep.subr.mxu0 0.0
    %277 = vmatpush1.msra.mxu0 0.0
    %278 = vmatprep.subr.mxu0 0.0
    %279 = vmatpush1.msra.mxu0 0.0
    %280 = vmatprep.subr.mxu0 0.0
    %281 = vmatpush1.msra.mxu0 0.0
    %282 = vmatprep.subr.mxu0 0.0
    %283 = vmatpush1.msra.mxu0 0.0
    %284 = vmatprep.subr.mxu0 0.0
    %285 = vmatpush1.msra.mxu0 0.0
    %286 = vmatprep.subr.mxu0 0.0
    %287 = vmatpush1.msra.mxu0 0.0
    %288 = vmatprep.subr.mxu0 0.0
    %289 = vmatpush1.msra.mxu0 0.0
    %290 = vmatprep.subr.mxu0 0.0
    %291 = vmatpush1.msra.mxu0 0.0
    %292 = vmatprep.subr.mxu0 0.0
    %293 = vmatpush1.msra.mxu0 0.0
    %294 = vmatprep.subr.mxu0 0.0
    %295 = vmatpush1.msra.mxu0 0.0
    %296 = vmatprep.mubr.f32.mxu0 0.0
    %v297 = vand.u32 %v72, 4294901760
    %v298 = vsub.f32 %v72, %v297
    %299 = vmatmul.mubr.f32.gmra.mrb[0].mxu0 %v298
    %v300 = vpop.f32.mrb[0].mxu0
    %v301 = vadd.f32 %v227, %v300
    %v302 = vpop.f32.mrb[0].mxu0
    %303 = vdwg.mxu0
    %304 = vmatprep.subr.mxu0 0.0
    %v305 = vand.u32 %v76, 4294901760
    %306 = vmatpush1.msra.mxu0 %v305
    %307 = vmatprep.subr.mxu0 0.0
    %308 = vmatpush1.msra.mxu0 0.0
    %309 = vmatprep.subr.mxu0 0.0
    %310 = vmatpush1.msra.mxu0 0.0
    %311 = vmatprep.subr.mxu0 0.0
    %312 = vmatpush1.msra.mxu0 0.0
    %313 = vmatprep.subr.mxu0 0.0
    %314 = vmatpush1.msra.mxu0 0.0
    %315 = vmatprep.subr.mxu0 0.0
    %316 = vmatpush1.msra.mxu0 0.0
    %317 = vmatprep.subr.mxu0 0.0
    %318 = vmatpush1.msra.mxu0 0.0
    %319 = vmatprep.subr.mxu0 0.0
    %320 = vmatpush1.msra.mxu0 0.0
    %321 = vmatprep.subr.mxu0 0.0
    %322 = vmatpush1.msra.mxu0 0.0
    %323 = vmatprep.subr.mxu0 0.0
    %324 = vmatpush1.msra.mxu0 0.0
    %325 = vmatprep.subr.mxu0 0.0
    %326 = vmatpush1.msra.mxu0 0.0
    %327 = vmatprep.subr.mxu0 0.0
    %328 = vmatpush1.msra.mxu0 0.0
    %329 = vmatprep.subr.mxu0 0.0
    %330 = vmatpush1.msra.mxu0 0.0
    %331 = vmatprep.subr.mxu0 0.0
    %332 = vmatpush1.msra.mxu0 0.0
    %333 = vmatprep.subr.mxu0 0.0
    %334 = vmatpush1.msra.mxu0 0.0
    %335 = vmatprep.subr.mxu0 0.0
    %336 = vmatpush1.msra.mxu0 0.0
    %337 = vmatprep.subr.mxu0 0.0
    %338 = vmatpush1.msra.mxu0 0.0
    %339 = vmatprep.subr.mxu0 0.0
    %340 = vmatpush1.msra.mxu0 0.0
    %341 = vmatprep.subr.mxu0 0.0
    %342 = vmatpush1.msra.mxu0 0.0
    %343 = vmatprep.subr.mxu0 0.0
    %344 = vmatpush1.msra.mxu0 0.0
    %345 = vmatprep.subr.mxu0 0.0
    %346 = vmatpush1.msra.mxu0 0.0
    %347 = vmatprep.subr.mxu0 0.0
    %348 = vmatpush1.msra.mxu0 0.0
    %349 = vmatprep.subr.mxu0 0.0
    %350 = vmatpush1.msra.mxu0 0.0
    %351 = vmatprep.subr.mxu0 0.0
    %352 = vmatpush1.msra.mxu0 0.0
    %353 = vmatprep.subr.mxu0 0.0
    %354 = vmatpush1.msra.mxu0 0.0
    %355 = vmatprep.subr.mxu0 0.0
    %356 = vmatpush1.msra.mxu0 0.0
    %357 = vmatprep.subr.mxu0 0.0
    %358 = vmatpush1.msra.mxu0 0.0
    %359 = vmatprep.subr.mxu0 0.0
    %360 = vmatpush1.msra.mxu0 0.0
    %361 = vmatprep.subr.mxu0 0.0
    %362 = vmatpush1.msra.mxu0 0.0
    %363 = vmatprep.subr.mxu0 0.0
    %364 = vmatpush1.msra.mxu0 0.0
    %365 = vmatprep.subr.mxu0 0.0
    %366 = vmatpush1.msra.mxu0 0.0
    %367 = vmatprep.subr.mxu0 0.0
    %368 = vmatpush1.msra.mxu0 0.0
    %369 = vmatprep.mubr.f32.mxu0 0.0
    %v370 = vand.u32 %v72, 4294901760
    %v371 = vsub.f32 %v72, %v370
    %v372 = vand.u32 %v371, 4294901760
    %373 = vmatmul.mubr.f32.gmra.mrb[0].mxu0 %v372
    %v374 = vpop.f32.mrb[0].mxu0
    %v375 = vadd.f32 %v301, %v374
    %v376 = vpop.f32.mrb[0].mxu0
    %377 = vdwg.mxu0
    %378 = vmatprep.subr.mxu0 0.0
    %v379 = vand.u32 %v76, 4294901760
    %v380 = vsub.f32 %v76, %v379
    %v381 = vand.u32 %v380, 4294901760
    %382 = vmatpush1.msra.mxu0 %v381
    %383 = vmatprep.subr.mxu0 0.0
    %384 = vmatpush1.msra.mxu0 0.0
    %385 = vmatprep.subr.mxu0 0.0
    %386 = vmatpush1.msra.mxu0 0.0
    %387 = vmatprep.subr.mxu0 0.0
    %388 = vmatpush1.msra.mxu0 0.0
    %389 = vmatprep.subr.mxu0 0.0
    %390 = vmatpush1.msra.mxu0 0.0
    %391 = vmatprep.subr.mxu0 0.0
    %392 = vmatpush1.msra.mxu0 0.0
    %393 = vmatprep.subr.mxu0 0.0
    %394 = vmatpush1.msra.mxu0 0.0
    %395 = vmatprep.subr.mxu0 0.0
    %396 = vmatpush1.msra.mxu0 0.0
    %397 = vmatprep.subr.mxu0 0.0
    %398 = vmatpush1.msra.mxu0 0.0
    %399 = vmatprep.subr.mxu0 0.0
    %400 = vmatpush1.msra.mxu0 0.0
    %401 = vmatprep.subr.mxu0 0.0
    %402 = vmatpush1.msra.mxu0 0.0
    %403 = vmatprep.subr.mxu0 0.0
    %404 = vmatpush1.msra.mxu0 0.0
    %405 = vmatprep.subr.mxu0 0.0
    %406 = vmatpush1.msra.mxu0 0.0
    %407 = vmatprep.subr.mxu0 0.0
    %408 = vmatpush1.msra.mxu0 0.0
    %409 = vmatprep.subr.mxu0 0.0
    %410 = vmatpush1.msra.mxu0 0.0
    %411 = vmatprep.subr.mxu0 0.0
    %412 = vmatpush1.msra.mxu0 0.0
    %413 = vmatprep.subr.mxu0 0.0
    %414 = vmatpush1.msra.mxu0 0.0
    %415 = vmatprep.subr.mxu0 0.0
    %416 = vmatpush1.msra.mxu0 0.0
    %417 = vmatprep.subr.mxu0 0.0
    %418 = vmatpush1.msra.mxu0 0.0
    %419 = vmatprep.subr.mxu0 0.0
    %420 = vmatpush1.msra.mxu0 0.0
    %421 = vmatprep.subr.mxu0 0.0
    %422 = vmatpush1.msra.mxu0 0.0
    %423 = vmatprep.subr.mxu0 0.0
    %424 = vmatpush1.msra.mxu0 0.0
    %425 = vmatprep.subr.mxu0 0.0
    %426 = vmatpush1.msra.mxu0 0.0
    %427 = vmatprep.subr.mxu0 0.0
    %428 = vmatpush1.msra.mxu0 0.0
    %429 = vmatprep.subr.mxu0 0.0
    %430 = vmatpush1.msra.mxu0 0.0
    %431 = vmatprep.subr.mxu0 0.0
    %432 = vmatpush1.msra.mxu0 0.0
    %433 = vmatprep.subr.mxu0 0.0
    %434 = vmatpush1.msra.mxu0 0.0
    %435 = vmatprep.subr.mxu0 0.0
    %436 = vmatpush1.msra.mxu0 0.0
    %437 = vmatprep.subr.mxu0 0.0
    %438 = vmatpush1.msra.mxu0 0.0
    %439 = vmatprep.subr.mxu0 0.0
    %440 = vmatpush1.msra.mxu0 0.0
    %441 = vmatprep.subr.mxu0 0.0
    %442 = vmatpush1.msra.mxu0 0.0
    %443 = vmatprep.subr.mxu0 0.0
    %444 = vmatpush1.msra.mxu0 0.0
    %445 = vmatprep.mubr.f32.mxu0 0.0
    %v446 = vand.u32 %v72, 4294901760
    %447 = vmatmul.mubr.f32.gmra.mrb[0].mxu0 %v446
    %v448 = vpop.f32.mrb[0].mxu0
    %v449 = vadd.f32 %v375, %v448
    %v450 = vpop.f32.mrb[0].mxu0
    %451 = vdwg.mxu0
    %452 = vmatprep.subr.mxu0 0.0
    %v453 = vand.u32 %v76, 4294901760
    %454 = vmatpush1.msra.mxu0 %v453
    %455 = vmatprep.subr.mxu0 0.0
    %456 = vmatpush1.msra.mxu0 0.0
    %457 = vmatprep.subr.mxu0 0.0
    %458 = vmatpush1.msra.mxu0 0.0
    %459 = vmatprep.subr.mxu0 0.0
    %460 = vmatpush1.msra.mxu0 0.0
    %461 = vmatprep.subr.mxu0 0.0
    %462 = vmatpush1.msra.mxu0 0.0
    %463 = vmatprep.subr.mxu0 0.0
    %464 = vmatpush1.msra.mxu0 0.0
    %465 = vmatprep.subr.mxu0 0.0
    %466 = vmatpush1.msra.mxu0 0.0
    %467 = vmatprep.subr.mxu0 0.0
    %468 = vmatpush1.msra.mxu0 0.0
    %469 = vmatprep.subr.mxu0 0.0
    %470 = vmatpush1.msra.mxu0 0.0
    %471 = vmatprep.subr.mxu0 0.0
    %472 = vmatpush1.msra.mxu0 0.0
    %473 = vmatprep.subr.mxu0 0.0
    %474 = vmatpush1.msra.mxu0 0.0
    %475 = vmatprep.subr.mxu0 0.0
    %476 = vmatpush1.msra.mxu0 0.0
    %477 = vmatprep.subr.mxu0 0.0
    %478 = vmatpush1.msra.mxu0 0.0
    %479 = vmatprep.subr.mxu0 0.0
    %480 = vmatpush1.msra.mxu0 0.0
    %481 = vmatprep.subr.mxu0 0.0
    %482 = vmatpush1.msra.mxu0 0.0
    %483 = vmatprep.subr.mxu0 0.0
    %484 = vmatpush1.msra.mxu0 0.0
    %485 = vmatprep.subr.mxu0 0.0
    %486 = vmatpush1.msra.mxu0 0.0
    %487 = vmatprep.subr.mxu0 0.0
    %488 = vmatpush1.msra.mxu0 0.0
    %489 = vmatprep.subr.mxu0 0.0
    %490 = vmatpush1.msra.mxu0 0.0
    %491 = vmatprep.subr.mxu0 0.0
    %492 = vmatpush1.msra.mxu0 0.0
    %493 = vmatprep.subr.mxu0 0.0
    %494 = vmatpush1.msra.mxu0 0.0
    %495 = vmatprep.subr.mxu0 0.0
    %496 = vmatpush1.msra.mxu0 0.0
    %497 = vmatprep.subr.mxu0 0.0
    %498 = vmatpush1.msra.mxu0 0.0
    %499 = vmatprep.subr.mxu0 0.0
    %500 = vmatpush1.msra.mxu0 0.0
    %501 = vmatprep.subr.mxu0 0.0
    %502 = vmatpush1.msra.mxu0 0.0
    %503 = vmatprep.subr.mxu0 0.0
    %504 = vmatpush1.msra.mxu0 0.0
    %505 = vmatprep.subr.mxu0 0.0
    %506 = vmatpush1.msra.mxu0 0.0
    %507 = vmatprep.subr.mxu0 0.0
    %508 = vmatpush1.msra.mxu0 0.0
    %509 = vmatprep.subr.mxu0 0.0
    %510 = vmatpush1.msra.mxu0 0.0
    %511 = vmatprep.subr.mxu0 0.0
    %512 = vmatpush1.msra.mxu0 0.0
    %513 = vmatprep.subr.mxu0 0.0
    %514 = vmatpush1.msra.mxu0 0.0
    %515 = vmatprep.subr.mxu0 0.0
    %516 = vmatpush1.msra.mxu0 0.0
    %517 = vmatprep.mubr.f32.mxu0 0.0
    %v518 = vand.u32 %v72, 4294901760
    %519 = vmatmul.mubr.f32.gmra.mrb[0].mxu0 %v518
    %v520 = vpop.f32.mrb[0].mxu0
    %v521 = vadd.f32 %v449, %v520
    %v522 = vpop.f32.mrb[0].mxu0
    %523 = vdwg.mxu0
    %v524 = vand.u32 2147483647, %v521
    %vm525 = vcmp.le.f32.partialorder %v524, 0.7853982
    %vm526 = vcmp.lt.s32.totalorder %v521, 0
    %v527 = vand.u32 %v521, 2139095040
    %v528 = vshrl.u32 %v527, 23
    %v529 = vsub.s32 %v528, 127
    %v530 = vand.u32 2147483647, %v521
    %v531 = vand.u32 %v530, 8388607
    %v532 = vor.u32 %v531, 8388608
    %v533 = vsub.s32 0, %v532
    %v534 = vadd.s32 %v529, 1
    %vm535 = vcmp.gt.s32.totalorder %v534, 0
    %v536 = vsel %vm535, %v534, 0
    %v537 = vshrl.u32 %v536, 5
    %v538 = vand.u32 %v536, 31
    %v539 = vsub.s32 32, %v538
    %v540 = vshrl.u32 683565275, %v539
    %v541 = vshll.u32 683565275, %v538
    %v542 = vshrl.u32 2475754826, %v539
    %v543 = vor.u32 %v541, %v542
    %v544 = vshll.u32 2475754826, %v538
    %v545 = vshrl.u32 2131351028, %v539
    %v546 = vor.u32 %v544, %v545
    %v547 = vshll.u32 2131351028, %v538
    %v548 = vshrl.u32 2102212464, %v539
    %v549 = vor.u32 %v547, %v548
    %v550 = vshll.u32 2102212464, %v538
    %v551 = vshrl.u32 920167782, %v539
    %v552 = vor.u32 %v550, %v551
    %v553 = vshll.u32 920167782, %v538
    %v554 = vshrl.u32 1326507024, %v539
    %v555 = vor.u32 %v553, %v554
    %vm556 = vcmp.lt.s32.totalorder %v537, 1
    %vm557 = vcmp.lt.s32.totalorder %v537, 2
    %vm558 = vcmp.lt.s32.totalorder %v537, 3
    %vm559 = vcmp.lt.s32.totalorder %v537, 4
    %v560 = vsel %vm556, %v540, %v543
    %v561 = vsel %vm559, %v549, 2102212464
    %v562 = vsel %vm558, %v546, %v561
    %v563 = vsel %vm557, %v560, %v562
    %v564 = vsel %vm556, %v543, %v546
    %v565 = vsel %vm559, %v552, 920167782
    %v566 = vsel %vm558, %v549, %v565
    %v567 = vsel %vm557, %v564, %v566
    %v568 = vsel %vm556, %v546, %v549
    %v569 = vsel %vm559, %v555, 1326507024
    %v570 = vsel %vm558, %v552, %v569
    %v571 = vsel %vm557, %v568, %v570
    %v572 = vshll.u32 %v532, 8
    %v573 = vmul.u32.u64.compose %v572, %v571
    %v574 = vextract.low.u32 %v573
    %v575 = vextract.high.u32 %v573
    %v576 = vmul.u32.u64.compose %v572, %v567
    %v577 = vextract.low.u32 %v576
    %v578 = vextract.high.u32 %v576
    %v579 = vmul.u32 %v572, %v563
    %v580 = vadd.s32 %v575, %v577
    %vm581 = vc.u32 %v575, %v577
    %v582 = vadd.s32 %v578, 1
    %v583 = vsel %vm581, %v582, %v578
    %v584 = vadd.s32 %v579, %v583
    %v585 = vadd.s32 %v584, 536870912
    %v586 = vshrl.u32 %v585, 30
    %v587 = vshll.u32 %v586, 30
    %v588 = vsub.s32 %v584, %v587
    %vm589 = vcmp.lt.s32.totalorder %v588, 0
    %v590 = vsub.s32 0, %v588
    %v591 = vsel %vm589, %v590, %v588
    %v592 = vclz %v591
    %v593 = vsub.s32 %v592, 2
    %vm594 = vcmp.gt.s32.totalorder 0, %v593
    %v595 = vsel %vm594, 0, %v593
    %v596 = vsub.s32 32, %v595
    %v597 = vshll.u32 %v588, %v595
    %v598 = vshrl.u32 %v580, %v596
    %v599 = vor.u32 %v597, %v598
    %v600 = vsub.s32 4294967266, %v595
    %v601 = vadd.s32 %v600, 127
    %v602 = vshll.u32 %v601, 23
    %v603 = vor.u32 4788187, %v602
    %v604 = vand.u32 2147483647, %v603
    %v606 = vcvt.s32.f32 %v599
    %v607 = vmul.f32 %v606, %v604
    %v608 = vxor.u32 %v607, 2147483648
    %v609 = vsel %vm526, %v608, %v607
    %v610 = vsub.s32 4, %v586
    %v611 = vsel %vm526, %v610, %v586
    %v612 = vsel %vm525, %v521, %v609
    %v613 = vsel %vm525, 0, %v611
    %v614 = vcosq.f32.pop %v612
    %v615 = vsinq.f32.pop %v612
    %vm616 = vweird.f32 %v521
    %v617 = vand.u32 %v613, 3
    %vm618 = vcmp.lt.s32.totalorder %v617, 2
    %vm619 = vcmp.eq.s32.totalorder %v617, 0
    %v620 = vxor.u32 %v615, 2147483648
    %v621 = vsel %vm619, %v614, %v620
    %vm622 = vcmp.eq.s32.totalorder %v617, 2
    %v623 = vxor.u32 %v614, 2147483648
    %v624 = vsel %vm622, %v623, %v615
    %v625 = vsel %vm618, %v621, %v624
    %v626 = vsel %vm616, nan, %v625
    %627 = vst [vmem:[#allocation7] sm:$0xff] %v626
    // Predicated region
    $region18: #{tpu_custom_call.1} parent=1 // pred_check
      _
    $region19: #{tpu_custom_call.1} parent=1 // pred_check_branch
      %629 = sbr.rel (0) target = $region21
    $region20: #{tpu_custom_call.1} parent=1 // pred_region
      %s631 = ssub.s32 128, 128
      %632 = vsyncadd [#allocation4], %s631
      %s634 = sshll.u32 [#allocation7], 4
      %s635 = int_to_ptr.vmem [resolvable:$true] %s634
      %637 = dma.vmem_to_hbm [thread:$0]  %s635, 128, %s2, [#allocation4]
    $region21: #{tpu_custom_call.1} parent=1 // pred_fallthru
      _
    // Predicated region
    $region22: #{tpu_custom_call.1} parent=1 // pred_check
      _
    $region23: #{tpu_custom_call.1} parent=1 // pred_check_branch
      %639 = sbr.rel (0) target = $region25
    $region24: #{tpu_custom_call.1} parent=1 // pred_region
      %640 = dma.done [#allocation4], 128
    $region25: #{tpu_custom_call.1} parent=1 // pred_fallthru
      _
    %641 = vsyncpa [#allocation3], 1
    %642 = vsyncpa [#allocation6], 1
    %643 = vsyncpa [#allocation4], 1

</llo_original>
